<compile_context>
chip_gen: v6e
topology: v6e:2x2x1
jax: 0.10.0
libtpu: 0.0.40
codegen_flags: <defaults>
</compile_context>

<pallas_src>
import functools

import jax
import jax.numpy as jnp
from jax.experimental import pallas as pl
from jax.experimental.pallas import tpu as pltpu


# ---------------------------------------------------------------------------
# Kernels
# ---------------------------------------------------------------------------

def _diffusion_matmul_kernel(p_ref, field_ref, out_ref):
    """One (batch, feature-tile) block: out = P @ field  (P = (I + s*L)^num_steps).

    p_ref:     VMEM f32[M, M]  -- constant index_map, stays resident across the grid
    field_ref: VMEM   [M, tD]  -- native layout block (batch dim squeezed)
    out_ref:   VMEM   [M, tD]
    """
    out_ref[...] = jnp.dot(
        p_ref[...],
        field_ref[...].astype(jnp.float32),
        preferred_element_type=jnp.float32,
    ).astype(out_ref.dtype)


def _diffusion_iter_kernel(scale_ref, field_ref, out_ref, *, num_steps: int):
    """Iterative fallback: num_steps explicit diffusion updates on one block.

    scale_ref: SMEM f32[1]     -- sigmoid(diff_coeff) * dt / dx**2
    field_ref: VMEM   [M, tD]  -- stencil axis M on sublanes
    out_ref:   VMEM   [M, tD]
    """
    s = scale_ref[0]
    f0 = field_ref[...].astype(jnp.float32)
    m = f0.shape[0]

    # Hoisted boundary-row masks (built once, reused by every step; JAX does
    # not CSE broadcast/iota inside the loop).
    rows = jax.lax.broadcasted_iota(jnp.int32, f0.shape, 0)
    is_top = rows == 0
    is_bot = rows == (m - 1)

    def one_step(_, f):
        # Circular neighbours via 2 XLU rotations (boundaries fixed below with
        # cheap row-slice math instead of 2 more full-tile rolls).
        up = pltpu.roll(f, m - 1, axis=0)           # up[i] = f[(i+1) % m]
        dn = pltpu.roll(f, 1, axis=0)               # dn[i] = f[(i-1) % m]
        f_new = f + s * (up + dn - 2.0 * f)
        # Edge rows copy the nearest interior laplacian row (matches PyTorch):
        #   lap[0] <- lap[1], lap[m-1] <- lap[m-2]
        lap_top = f[2:3, :] + f[0:1, :] - 2.0 * f[1:2, :]
        lap_bot = f[m - 1:m, :] + f[m - 3:m - 2, :] - 2.0 * f[m - 2:m - 1, :]
        f_new = jnp.where(is_top, f[0:1, :] + s * lap_top, f_new)
        f_new = jnp.where(is_bot, f[m - 1:m, :] + s * lap_bot, f_new)
        # TODO(synk): TokenFieldInterference (class not given) treated as identity.
        return f_new

    f = jax.lax.fori_loop(0, num_steps, one_step, f0, unroll=True)
    out_ref[...] = f.astype(out_ref.dtype)


# ---------------------------------------------------------------------------
# Wrapper
# ---------------------------------------------------------------------------

def _tpu_vmem_capacity_bytes() -> int:
    try:
        info = pltpu.get_tpu_info()
        cap = getattr(info, "vmem_capacity_bytes", None)
        if cap:
            return int(cap)
    except Exception:
        pass
    return 64 << 20          # conservative (v7x-sized) fallback


def _pick_feature_tile(D: int, M: int, itemsize: int, block_budget_bytes: int) -> int:
    """Largest 128-multiple tile of the feature axis that fits the per-block
    VMEM budget (input + output blocks, each double-buffered)."""
    if D % 128 != 0:
        return D             # block must equal the full (non-128-multiple) dim
    for k in range(D // 128, 0, -1):
        t = 128 * k
        if D % t:
            continue
        if 4 * M * t * itemsize <= block_budget_bytes:
            return t
    return 128


def dynamic_field_propagator(field: jax.Array,
                             grid_points: jax.Array,
                             *,
                             num_steps: int = 4,
                             dt: float = 0.01,
                             diffusion_coeff: float = 0.1,
                             impl: str = "auto") -> jax.Array:
    """JAX/Pallas equivalent of DynamicFieldPropagator(evolution_type='diffusion').

    field:       f32[B, M, D]
    grid_points: f32[B, M, P]   (only grid_points[0,1,0]-grid_points[0,0,0] is used)
    returns:     f32[B, M, D]
    """
    B, M, D = field.shape
    assert M >= 3, "diffusion stencil needs at least 3 grid points"
    itemsize = jnp.dtype(field.dtype).itemsize

    cap = _tpu_vmem_capacity_bytes()
    default_limit = min(cap // 2, 64 << 20)          # 64 MiB v5e/v6e, 32 MiB v7x
    block_budget = default_limit // 8

    dx = grid_points[0, 1, 0] - grid_points[0, 0, 0]
    d_coef = jax.nn.sigmoid(jnp.float32(diffusion_coeff))
    # NOTE: explicit-Euler diffusion is only stable for scale < 0.5; dx is a
    # traced runtime value so we cannot Python-assert that here.
    scale = (d_coef * jnp.float32(dt) / (dx * dx)).astype(jnp.float32)

    tD = _pick_feature_tile(D, M, itemsize, block_budget)
    n_tiles = D // tD

    if impl == "auto":
        impl = "matmul" if 2 * M * M * 4 <= block_budget else "iterative"

    field_spec = pl.BlockSpec((pl.Squeezed(), M, tD), lambda b, j: (b, 0, j))

    if impl == "matmul":
        # The boundary-corrected diffusion step is linear: f_new = (I + s*L) f.
        eye = jnp.eye(M, dtype=jnp.float32)
        L = (jnp.eye(M, k=1, dtype=jnp.float32)
             + jnp.eye(M, k=-1, dtype=jnp.float32) - 2.0 * eye)
        L = L.at[0].set(L[1])                 # lap[0]   <- lap[1]
        L = L.at[M - 1].set(L[M - 2])         # lap[M-1] <- lap[M-2]
        # TODO(synk): TokenFieldInterference treated as identity, so the whole
        #             forward collapses to P = (I + s*L)^num_steps.
        P_op = jnp.linalg.matrix_power(eye + scale * L, num_steps)

        usage = 2 * M * M * 4 + 4 * M * tD * itemsize + (2 << 20)
        vmem_limit = min(max(default_limit, usage), cap)

        return pl.pallas_call(
            _diffusion_matmul_kernel,
            out_shape=jax.ShapeDtypeStruct((B, M, D), field.dtype),
            grid=(B, n_tiles),
            in_specs=[
                pl.BlockSpec((M, M), lambda b, j: (0, 0)),    # operator, resident
                field_spec,
            ],
            out_specs=field_spec,
            input_output_aliases={1: 0},                      # in-place update
            compiler_params=pltpu.CompilerParams(
                dimension_semantics=("parallel", "parallel"),
                vmem_limit_bytes=vmem_limit,
            ),
        )(P_op, field)

    # Iterative fallback (very large M).
    usage = 4 * M * tD * itemsize + (2 << 20)
    vmem_limit = min(max(default_limit, usage), cap)
    kernel = functools.partial(_diffusion_iter_kernel, num_steps=num_steps)

    return pl.pallas_call(
        kernel,
        out_shape=jax.ShapeDtypeStruct((B, M, D), field.dtype),
        grid=(B, n_tiles),
        in_specs=[
            pl.BlockSpec(memory_space=pltpu.MemorySpace.SMEM),    # scale scalar
            field_spec,
        ],
        out_specs=field_spec,
        input_output_aliases={1: 0},
        compiler_params=pltpu.CompilerParams(
            dimension_semantics=("parallel", "parallel"),
            vmem_limit_bytes=vmem_limit,
        ),
    )(scale.reshape(1), field)


# ---------------------------------------------------------------------------
# Pure-JAX reference & self-test
# ---------------------------------------------------------------------------

def _reference(field, grid_points, *, num_steps=4, dt=0.01, diffusion_coeff=0.1):
    """Pure-JAX reference mirroring the PyTorch forward (interference = identity)."""
    dx = grid_points[0, 1, 0] - grid_points[0, 0, 0]
    d_coef = jax.nn.sigmoid(jnp.float32(diffusion_coeff))
    f = field
    for _ in range(num_steps):
        interior = (f[:, 2:, :] - 2.0 * f[:, 1:-1, :] + f[:, :-2, :]) / (dx * dx)
        lap = jnp.concatenate(
            [interior[:, :1, :], interior, interior[:, -1:, :]], axis=1)
        f = f + d_coef * dt * lap
    return f


if __name__ == "__main__":
    B, M, D, P = 2, 16, 32, 3

    key = jax.random.PRNGKey(0)
    k_field, _ = jax.random.split(key)

    def make_inputs():
        fld = jax.random.normal(k_field, (B, M, D), dtype=jnp.float32)
        coords = jnp.linspace(0.0, 4.0, M, dtype=jnp.float32)            # (M,)
        gpts = jnp.broadcast_to(coords[None, :, None], (B, M, P)).astype(jnp.float32)
        return fld, gpts

    field, grid_points = make_inputs()
    ref = _reference(field, grid_points, num_steps=4, dt=0.01, diffusion_coeff=0.1)
    ref = jax.block_until_ready(ref)

    # Primary path: precomputed-operator MXU matmul.
    out_mm = dynamic_field_propagator(field, grid_points, num_steps=4, dt=0.01,
                                      diffusion_coeff=0.1, impl="matmul")
    out_mm = jax.block_until_ready(out_mm)
    assert out_mm.shape == (B, M, D)
    assert jnp.allclose(out_mm, ref, atol=1e-4, rtol=1e-4), "matmul path mismatch"

    # Iterative fallback path (fresh inputs: the field buffer is aliased/donated).
    field2, grid_points2 = make_inputs()
    out_it = dynamic_field_propagator(field2, grid_points2, num_steps=4, dt=0.01,
                                      diffusion_coeff=0.1, impl="iterative")
    out_it = jax.block_until_ready(out_it)
    assert out_it.shape == (B, M, D)
    assert jnp.allclose(out_it, ref, atol=1e-4, rtol=1e-4), "iterative path mismatch"

    print("KERNEL_OK")
</pallas_src>

<mosaic_0001>
module attributes {stable_mosaic.version = 11 : i64} {
  func.func @_diffusion_matmul_kernel(%arg0: i32, %arg1: i32, %arg2: memref<16x16xf32, #tpu.memory_space<vmem>>, %arg3: memref<1x16x32xf32, #tpu.memory_space<vmem>>, %arg4: memref<1x16x32xf32, #tpu.memory_space<vmem>>) attributes {dimension_semantics = [#tpu.dimension_semantics<parallel>, #tpu.dimension_semantics<parallel>], iteration_bounds = array<i64: 2, 1>, scalar_prefetch = 0 : i64, scratch_operands = 0 : i64, tpu.core_type = #tpu.core_type<tc>, window_params = [{pipeline_mode = #tpu.pipeline_mode<synchronous>, transform_indices = @transform_0, window_bounds = array<i64: 16, 16>}, {transform_indices = @transform_1, window_bounds = array<i64: 1, 16, 32>}, {transform_indices = @transform_2, window_bounds = array<i64: 1, 16, 32>}]} {
    %c0 = arith.constant 0 : index
    %c0_0 = arith.constant 0 : index
    %0 = vector.load %arg2[%c0, %c0_0] : memref<16x16xf32, #tpu.memory_space<vmem>>, vector<16x16xf32>
    %c0_1 = arith.constant 0 : index
    %c0_2 = arith.constant 0 : index
    %c0_3 = arith.constant 0 : index
    %1 = vector.load %arg3[%c0_1, %c0_2, %c0_3] : memref<1x16x32xf32, #tpu.memory_space<vmem>>, vector<1x16x32xf32>
    %2 = vector.shape_cast %1 : vector<1x16x32xf32> to vector<16x32xf32>
    %cst = arith.constant dense<0.000000e+00> : vector<16x32xf32>
    %3 = tpu.matmul %0, %2, %cst {dimension_numbers = #tpu.dot_dimension_numbers<[1], [0], [0], [1], [0, 0, 1, 1], [], []>} : vector<16x16xf32>, vector<16x32xf32>, vector<16x32xf32> -> vector<16x32xf32>
    %c0_4 = arith.constant 0 : index
    %c0_5 = arith.constant 0 : index
    %c0_6 = arith.constant 0 : index
    %4 = vector.load %arg4[%c0_4, %c0_5, %c0_6] : memref<1x16x32xf32, #tpu.memory_space<vmem>>, vector<1x16x32xf32>
    %5 = vector.shape_cast %4 : vector<1x16x32xf32> to vector<16x32xf32>
    %6 = vector.shape_cast %3 : vector<16x32xf32> to vector<1x16x32xf32>
    tpu.vector_store %arg4[%c0_4, %c0_5, %c0_6], %6 {strides = array<i32>} : memref<1x16x32xf32, #tpu.memory_space<vmem>>, vector<1x16x32xf32>,
    return
  }
  func.func @transform_0(%arg0: i32, %arg1: i32) -> (i32, i32) {
    %c0_i32 = arith.constant 0 : i32
    %c0_i32_0 = arith.constant 0 : i32
    %c0_i32_1 = arith.constant 0 : i32
    return %c0_i32, %c0_i32_0 : i32, i32
  }
  func.func @transform_1(%arg0: i32, %arg1: i32) -> (i32, i32, i32) {
    %c0_i32 = arith.constant 0 : i32
    %c0_i32_0 = arith.constant 0 : i32
    return %arg0, %c0_i32, %arg1 : i32, i32, i32
  }
  func.func @transform_2(%arg0: i32, %arg1: i32) -> (i32, i32, i32) {
    %c0_i32 = arith.constant 0 : i32
    %c0_i32_0 = arith.constant 0 : i32
    return %arg0, %c0_i32, %arg1 : i32, i32, i32
  }
}

</mosaic_0001>

<llo_original>
// kernel: tpu_custom_call.1
$region0: #{tpu_custom_call.1}
  #allocation0 [shape = 'u32[]', space=smem, size = 0x4, offset = 0x4, fixed_abs, tag = 'smem constant byte address 0x4 - core index']
  #allocation1 [shape = 'u32[144,128]{1,0:T(1,128)}', space=vmem, size = 0x12000, scoped, tag = 'internal scratch']
  %s0 = inlined_call_operand.vmem [shape: f32[16,16], index: 0, kind: input, shape index: {}]
  %s1 = inlined_call_operand.hbm [shape: f32[2,16,32], index: 1, kind: input, shape index: {}, may-alias: {1,2}]
  %s2 = inlined_call_operand.hbm [shape: f32[2,16,32], index: 2, kind: output, shape index: {}, may-alias: {1,2}]
  %s3 = sld [smem:[#allocation0]]
  $region45: #{tpu_custom_call.1} parent=0
    _
  %s5 = ssub.s32 1, %s3
  %s6 = scalar_select 0, %s5, %s3
  $region1: #{tpu_custom_call.1} parent=0
    #allocation2 [shape = 'u8[16384]{0}', space=vmem, size = 0x4000, scoped, tag = 'input window, operand 1']
    #allocation3 [shape = 's32[2]{0}', space=sflag, size = 0x8, scoped, tag = 'scoped memory for tpu_custom_call.1']
    #allocation4 [shape = 's32[2]{0}', space=sflag, size = 0x8, scoped, tag = 'scoped memory for tpu_custom_call.1']
    #allocation5 [shape = 'u8[16384]{0}', space=vmem, size = 0x4000, scoped, tag = 'output window, operand 0']
    %7 = vsyncpa [#allocation3], 0
    %s8 = scalar_lea.sflag [#allocation3], 1
    %9 = vsyncpa %s8, 0
    %10 = vsyncpa [#allocation4], 0
    %s11 = scalar_lea.sflag [#allocation4], 1
    %12 = vsyncpa %s11, 0
    loop: start=0, step=1, limit=4
    $region2: #{tpu_custom_call.1} parent=1 // loop_pre_header
      _
    $region3: #{tpu_custom_call.1} parent=1 // loop_header
      %s14 = sphi 0, %s18
      %p15 = scmp.ge.s32.totalorder %s14, 4
      %s21 = sphi 0, %s33
      %s22 = sphi 0, %s29
      %s23 = sphi 0, %s21
      %s24 = sphi 0, %s22
      %s25 = sphi 0, %s23
      %s26 = sphi 0, %s24
      %s34 = sphi 0, %s34
      %s36 = sphi 0, %s34
      %s37 = sphi 0, %s36
      %s51 = sphi 0, %s37
      %s59 = sphi 0, %s61
      %s62 = sphi 0, %s59
      %s63 = sphi 0, %s62
      %s79 = sphi 0, %s63
      %s87 = sphi 0, %s89
      %s90 = sphi 0, %s87
      %s91 = sphi 0, %s90
      %s107 = sphi 0, %s91
    $region4: #{tpu_custom_call.1} parent=1 // loop_header_branch
      %17 = sbr.rel (%p15) target = $region8
    $region5: #{tpu_custom_call.1} parent=1 // loop_body
      %s19 = ssub.s32 %s14, 1
      %s20 = ssub.s32 %s14, 2
      %s27 = sadd.s32 1, %s22
      %p28 = scmp.ge.s32.totalorder %s27, 1
      %s29 = scalar_select %p28, 0, %s27
      %s30 = sadd.s32 1, %s21
      %s31 = scalar_select %p28, %s30, %s21
      %p32 = scmp.ge.s32.totalorder %s31, 2
      %s33 = scalar_select %p32, 0, %s31
      %s35 = sadd.s32 %s34, 1
      %p38 = scmp.eq.s32.totalorder %s14, 1
      %p39 = scmp.ne.s32.totalorder %s34, %s36
      %p40 = scmp.eq.s32.totalorder %s14, 0
      %p41 = por %p39, %p40
      %p42 = scmp.ne.s32.totalorder %s34, %s36
      %p43 = scmp.eq.s32.totalorder %s19, 1
      %p44 = por %p42, %p43
      %p45 = scmp.ne.s32.totalorder %s36, %s37
      %p46 = scmp.eq.s32.totalorder %s19, 0
      %p47 = por %p45, %p46
      %p48 = scmp.ne.s32.totalorder %s36, %s37
      %p49 = scmp.eq.s32.totalorder %s20, 1
      %p50 = por %p48, %p49
      %p52 = scmp.ne.s32.totalorder %s37, %s51
      %p53 = scmp.eq.s32.totalorder %s20, 0
      %p54 = por %p52, %p53
      %s55 = ssub.s32 %s21, %s33
      %s56 = ssub.s32 %s22, %s29
      %s57 = sor.u32 %s55, %s56
      %p58 = scmp.eq.s32.totalorder %s57, 0
      %s60 = sadd.s32 %s59, 1
      %s61 = scalar_select %p58, %s59, %s60
      %p64 = pneg %p58
      %p65 = scmp.eq.s32.totalorder %s14, 1
      %p66 = por %p64, %p65
      %p67 = scmp.ne.s32.totalorder %s59, %s62
      %p68 = scmp.eq.s32.totalorder %s14, 0
      %p69 = por %p67, %p68
      %p70 = scmp.ne.s32.totalorder %s59, %s62
      %p71 = scmp.eq.s32.totalorder %s19, 1
      %p72 = por %p70, %p71
      %p73 = scmp.ne.s32.totalorder %s62, %s63
      %p74 = scmp.eq.s32.totalorder %s19, 0
      %p75 = por %p73, %p74
      %p76 = scmp.ne.s32.totalorder %s62, %s63
      %p77 = scmp.eq.s32.totalorder %s20, 1
      %p78 = por %p76, %p77
      %p80 = scmp.ne.s32.totalorder %s63, %s79
      %p81 = scmp.eq.s32.totalorder %s20, 0
      %p82 = por %p80, %p81
      %s83 = ssub.s32 %s21, %s33
      %s84 = ssub.s32 %s22, %s29
      %s85 = sor.u32 %s83, %s84
      %p86 = scmp.eq.s32.totalorder %s85, 0
      %s88 = sadd.s32 %s87, 1
      %s89 = scalar_select %p86, %s87, %s88
      %p92 = pneg %p86
      %p93 = scmp.eq.s32.totalorder %s14, 1
      %p94 = por %p92, %p93
      %p95 = scmp.ne.s32.totalorder %s87, %s90
      %p96 = scmp.eq.s32.totalorder %s14, 0
      %p97 = por %p95, %p96
      %p98 = scmp.ne.s32.totalorder %s87, %s90
      %p99 = scmp.eq.s32.totalorder %s19, 1
      %p100 = por %p98, %p99
      %p101 = scmp.ne.s32.totalorder %s90, %s91
      %p102 = scmp.eq.s32.totalorder %s19, 0
      %p103 = por %p101, %p102
      %p104 = scmp.ne.s32.totalorder %s90, %s91
      %p105 = scmp.eq.s32.totalorder %s20, 1
      %p106 = por %p104, %p105
      %p108 = scmp.ne.s32.totalorder %s91, %s107
      %p109 = scmp.eq.s32.totalorder %s20, 0
      %p110 = por %p108, %p109
      %p111 = scmp.le.s32.totalorder 1, %s14
      %p112 = scmp.lt.s32.totalorder %s14, 3
      %p113 = pnand %p111, %p112
      %p114 = pneg %p113
      // Predicated region
      $region9: #{tpu_custom_call.1} parent=5 // pred_check
        _
      $region10: #{tpu_custom_call.1} parent=5 // pred_check_branch
        %116 = sbr.rel (%p113) target = $region12
      $region11: #{tpu_custom_call.1} parent=5 // pred_region
        %s117 = ssub.s32 %s14, 1
        // Predicated region
        $region13: #{tpu_custom_call.1} parent=11 // pred_check
          %p118 = pneg %p47
        $region14: #{tpu_custom_call.1} parent=11 // pred_check_branch
          %120 = sbr.rel (%p118) target = $region16
        $region15: #{tpu_custom_call.1} parent=11 // pred_region
          _
        $region16: #{tpu_custom_call.1} parent=11 // pred_fallthru
          _
      $region12: #{tpu_custom_call.1} parent=5 // pred_fallthru
        _
      %p121 = scmp.lt.s32.totalorder %s14, 2
      // Predicated region
      $region17: #{tpu_custom_call.1} parent=5 // pred_check
        %p122 = pneg %p121
      $region18: #{tpu_custom_call.1} parent=5 // pred_check_branch
        %124 = sbr.rel (%p122) target = $region20
      $region19: #{tpu_custom_call.1} parent=5 // pred_region
        // Predicated region
        $region21: #{tpu_custom_call.1} parent=19 // pred_check
          %p125 = pneg %p69
        $region22: #{tpu_custom_call.1} parent=19 // pred_check_branch
          %127 = sbr.rel (%p125) target = $region24
        $region23: #{tpu_custom_call.1} parent=19 // pred_region
          %s128 = sand.u32 %s59, 1
          %s129 = scalar_lea.sflag [#allocation3], %s128
          %s130 = sand.u32 %s59, 1
          %s131 = smul.addr %s130, 16
          %s132 = scalar_lea.vmem [#allocation2], %s131
          %s134 = ssub.s32 256, 256
          %135 = vsyncadd %s129, %s134
          %s136 = smul.addr %s21, 2
          %s137 = sadd.s32 %s22, %s136
          %s138 = smul.addr %s137, 128
          %s139 = scalar_lea.hbm %s1, %s138
          %s140 = sshll.u32 %s132, 4
          %s141 = int_to_ptr.vmem [resolvable:$true] %s140
          %146 = dma.hbm_to_vmem [thread:$0]  %s139, 256, %s141, %s129, 128, 128, 8
        $region24: #{tpu_custom_call.1} parent=19 // pred_fallthru
          _
      $region20: #{tpu_custom_call.1} parent=5 // pred_fallthru
        _
      %p147 = scmp.le.s32.totalorder 1, %s14
      %p148 = scmp.lt.s32.totalorder %s14, 3
      %p149 = pnand %p147, %p148
      %p150 = pneg %p149
      // Predicated region
      $region25: #{tpu_custom_call.1} parent=5 // pred_check
        _
      $region26: #{tpu_custom_call.1} parent=5 // pred_check_branch
        %152 = sbr.rel (%p149) target = $region28
      $region27: #{tpu_custom_call.1} parent=5 // pred_region
        %s153 = ssub.s32 %s14, 1
        %s154 = sand.u32 %s62, 1
        %s155 = scalar_lea.sflag [#allocation3], %s154
        %s156 = sand.u32 %s62, 1
        %s157 = smul.addr %s156, 16
        %s158 = scalar_lea.vmem [#allocation2], %s157
        // Predicated region
        $region29: #{tpu_custom_call.1} parent=27 // pred_check
          %p159 = pneg %p75
        $region30: #{tpu_custom_call.1} parent=27 // pred_check_branch
          %161 = sbr.rel (%p159) target = $region32
        $region31: #{tpu_custom_call.1} parent=27 // pred_region
          %162 = dma.done %s155, 256
        $region32: #{tpu_custom_call.1} parent=27 // pred_fallthru
          _
        %p163 = pneg %p47
        %p164 = pneg %p44
        %s165 = sand.u32 %s62, 1
        %s166 = scalar_lea.sflag [#allocation3], %s165
        %s167 = sand.u32 %s62, 1
        %s168 = smul.addr %s167, 16
        %s169 = scalar_lea.vmem [#allocation2], %s168
        %p170 = pneg %p75
        %p171 = pneg %p72
        %p172 = pneg %p103
        %p173 = pneg %p100
        %s174 = sand.u32 %s90, 1
        %s175 = scalar_lea.sflag [#allocation4], %s174
        %s176 = sand.u32 %s90, 1
        %s177 = smul.addr %s176, 16
        %s178 = scalar_lea.vmem [#allocation5], %s177
        %v179 = vld [vmem:[%s0] sm:$0xff]
        %v180 = vld [vmem:[%s0 + $0x8] sm:$0xff]
        %v181 = vld [vmem:[%s158] sm:$0xff]
        %v182 = vld [vmem:[%s158 + $0x8] sm:$0xff]
        %vm183 = vcmask 130048
        %v185 = vsel %vm183, %v179, 0
        %v188 = vsel %vm183, %v180, 0
        %190 = vmatprep.subr.mxu0 0.0
        %191 = vmatpush1.msra.mxu0 0.0
        %192 = vmatprep.subr.mxu0 0.0
        %193 = vmatpush1.msra.mxu0 0.0
        %194 = vmatprep.subr.mxu0 0.0
        %195 = vmatpush1.msra.mxu0 0.0
        %196 = vmatprep.subr.mxu0 0.0
        %197 = vmatpush1.msra.mxu0 0.0
        %198 = vmatprep.subr.mxu0 0.0
        %199 = vmatpush1.msra.mxu0 0.0
        %200 = vmatprep.subr.mxu0 0.0
        %201 = vmatpush1.msra.mxu0 0.0
        %202 = vmatprep.subr.mxu0 0.0
        %203 = vmatpush1.msra.mxu0 0.0
        %204 = vmatprep.subr.mxu0 0.0
        %205 = vmatpush1.msra.mxu0 0.0
        %206 = vmatprep.subr.mxu0 0.0
        %207 = vmatpush1.msra.mxu0 0.0
        %208 = vmatprep.subr.mxu0 0.0
        %209 = vmatpush1.msra.mxu0 0.0
        %210 = vmatprep.subr.mxu0 0.0
        %211 = vmatpush1.msra.mxu0 0.0
        %212 = vmatprep.subr.mxu0 0.0
        %213 = vmatpush1.msra.mxu0 0.0
        %214 = vmatprep.subr.mxu0 0.0
        %215 = vmatpush1.msra.mxu0 0.0
        %216 = vmatprep.subr.mxu0 0.0
        %217 = vmatpush1.msra.mxu0 0.0
        %218 = vmatprep.subr.mxu0 0.0
        %219 = vmatpush1.msra.mxu0 %v182
        %220 = vmatprep.subr.mxu0 0.0
        %221 = vmatpush1.msra.mxu0 %v181
        %222 = vmatprep.subr.mxu0 0.0
        %223 = vmatpush2.msra.mxu0 0.0
        %224 = vmatprep.subr.mxu0 0.0
        %225 = vmatpush2.msra.mxu0 0.0
        %226 = vmatprep.subr.mxu0 0.0
        %227 = vmatpush2.msra.mxu0 0.0
        %228 = vmatprep.subr.mxu0 0.0
        %229 = vmatpush2.msra.mxu0 0.0
        %230 = vmatprep.subr.mxu0 0.0
        %231 = vmatpush2.msra.mxu0 0.0
        %232 = vmatprep.subr.mxu0 0.0
        %233 = vmatpush2.msra.mxu0 0.0
        %234 = vmatprep.subr.mxu0 0.0
        %235 = vmatpush2.msra.mxu0 0.0
        %236 = vmatprep.subr.mxu0 0.0
        %237 = vmatpush2.msra.mxu0 0.0
        %238 = vmatprep.subr.mxu0 0.0
        %239 = vmatpush2.msra.mxu0 0.0
        %240 = vmatprep.subr.mxu0 0.0
        %241 = vmatpush2.msra.mxu0 0.0
        %242 = vmatprep.subr.mxu0 0.0
        %243 = vmatpush2.msra.mxu0 0.0
        %244 = vmatprep.subr.mxu0 0.0
        %245 = vmatpush2.msra.mxu0 0.0
        %246 = vmatprep.subr.mxu0 0.0
        %247 = vmatpush2.msra.mxu0 0.0
        %248 = vmatprep.subr.mxu0 0.0
        %249 = vmatpush2.msra.mxu0 0.0
        %250 = vmatprep.subr.mxu0 0.0
        %251 = vmatpush2.msra.mxu0 0.0
        %252 = vmatprep.subr.mxu0 0.0
        %253 = vmatpush2.msra.mxu0 0.0
        %254 = vmatprep.mubr.f32.mxu0 0.0
        %255 = vmatmul.mubr.f32.gmra.mxu0 %v185
        %v256 = vpop.f32.mrf.mxu0
        %v257 = vadd.f32 0.0, %v256
        %v258 = vpop.f32.mrf.mxu0
        %259 = vmatprep.mubr.f32.mxu0 0.0
        %260 = vmatmul.mubr.f32.gmra.mxu0 %v188
        %v261 = vpop.f32.mrf.mxu0
        %v262 = vadd.f32 0.0, %v261
        %v263 = vpop.f32.mrf.mxu0
        %264 = vdwg.mxu0
        %vm265 = vcmask 261120
        %266 = vst.msk [vmem:[%s178] sm:$0xff] %vm265, %v257
        %267 = vst.msk [vmem:[%s178 + $0x8] sm:$0xff] %vm265, %v262
        %s268 = sand.u32 %s90, 1
        %s269 = scalar_lea.sflag [#allocation4], %s268
        %s270 = sand.u32 %s90, 1
        %s271 = smul.addr %s270, 16
        %s272 = scalar_lea.vmem [#allocation5], %s271
        // Predicated region
        $region33: #{tpu_custom_call.1} parent=27 // pred_check
          %p273 = pneg %p100
        $region34: #{tpu_custom_call.1} parent=27 // pred_check_branch
          %275 = sbr.rel (%p273) target = $region36
        $region35: #{tpu_custom_call.1} parent=27 // pred_region
          %s277 = ssub.s32 256, 256
          %278 = vsyncadd %s269, %s277
          %s279 = smul.addr %s23, 2
          %s280 = sadd.s32 %s24, %s279
          %s281 = smul.addr %s280, 128
          %s282 = scalar_lea.hbm %s2, %s281
          %s283 = sshll.u32 %s272, 4
          %s284 = int_to_ptr.vmem [resolvable:$true] %s283
          %289 = dma.vmem_to_hbm [thread:$0]  %s284, 256, %s282, %s269, 128, 128, 8
        $region36: #{tpu_custom_call.1} parent=27 // pred_fallthru
          _
      $region28: #{tpu_custom_call.1} parent=5 // pred_fallthru
        _
      %p290 = scmp.le.s32.totalorder 2, %s14
      // Predicated region
      $region37: #{tpu_custom_call.1} parent=5 // pred_check
        %p291 = pneg %p290
      $region38: #{tpu_custom_call.1} parent=5 // pred_check_branch
        %293 = sbr.rel (%p291) target = $region40
      $region39: #{tpu_custom_call.1} parent=5 // pred_region
        %s294 = ssub.s32 %s14, 2
        // Predicated region
        $region41: #{tpu_custom_call.1} parent=39 // pred_check
          %p295 = pneg %p106
        $region42: #{tpu_custom_call.1} parent=39 // pred_check_branch
          %297 = sbr.rel (%p295) target = $region44
        $region43: #{tpu_custom_call.1} parent=39 // pred_region
          %s298 = sand.u32 %s91, 1
          %s299 = scalar_lea.sflag [#allocation4], %s298
          %s300 = sand.u32 %s91, 1
          %s301 = smul.addr %s300, 16
          %s302 = scalar_lea.vmem [#allocation5], %s301
          %303 = dma.done %s299, 256
        $region44: #{tpu_custom_call.1} parent=39 // pred_fallthru
          _
      $region40: #{tpu_custom_call.1} parent=5 // pred_fallthru
        _
    $region6: #{tpu_custom_call.1} parent=1 // loop_footer
      %s18 = sadd.s32 1, %s14
    $region7: #{tpu_custom_call.1} parent=1 // loop_footer_branch
      %13 = sbr.rel target = $region3
    $region8: #{tpu_custom_call.1} parent=1 // loop_exit
      _
    %304 = vsyncpa [#allocation3], 1
    %s305 = scalar_lea.sflag [#allocation3], 1
    %306 = vsyncpa %s305, 1
    %307 = vsyncpa [#allocation4], 1
    %s308 = scalar_lea.sflag [#allocation4], 1
    %309 = vsyncpa %s308, 1

</llo_original>
